<compile_context>
chip_gen: v7x
topology: tpu7x:2x2x1
jax: 0.10.0
libtpu: 0.0.40
codegen_flags: <defaults>
</compile_context>

<pallas_src>
import jax
import jax.numpy as jnp
from jax.experimental import pallas as pl
from jax.experimental.pallas import tpu as pltpu


def _make_dma_copy_kernel(n_chunks, chunk_rows):
    """Kernel factory: chunked HBM->HBM DMA identity copy.

    `n_chunks` / `chunk_rows` are static Python ints baked into the kernel, so
    every DMA descriptor uses compile-time offsets; all starts are issued
    before any wait so the chunks run concurrently on the DMA engines.
    """

    def kernel(x_hbm, o_hbm, copy_sems):
        if n_chunks == 1:
            cp = pltpu.make_async_copy(x_hbm, o_hbm, copy_sems.at[0])
            cp.start()
            cp.wait()
            return
        copies = []
        for i in range(n_chunks):
            start = i * chunk_rows
            cp = pltpu.make_async_copy(
                x_hbm.at[pl.ds(start, chunk_rows), :],
                o_hbm.at[pl.ds(start, chunk_rows), :],
                copy_sems.at[i],
            )
            cp.start()
            copies.append(cp)
        for cp in copies:
            cp.wait()

    return kernel


def _choose_flat_layout(total):
    """Lane-dense (rows, lane) factorization of the flat element count."""
    for lane in (512, 256, 128):
        if total % lane == 0:
            return total // lane, lane
    return None


def _choose_chunking(rows, itemsize, max_chunks=8):
    """Split `rows` into equal, sublane-tile-aligned chunks (dtype aware)."""
    # Sublane quantum: 8 rows for 32-bit, 16 for bf16, 32 for int8/fp8, so a
    # chunk boundary never splits a packed HBM tile.
    sub_q = 8 * max(1, 4 // itemsize)
    for n in range(max_chunks, 1, -1):
        if rows % n == 0 and (rows // n) % sub_q == 0:
            return n, rows // n
    return 1, rows


def make2d(x, w, h):
    """Pallas equivalent of Make2D(w, h).forward(x).

    x: (N, ...) array whose per-batch element count is divisible by w*h.
    returns: (N, -1, w, h) array, same dtype (row-major reshape semantics).
    """
    n = x.shape[0]
    total = x.size
    per_batch = total // n
    assert per_batch * n == total
    assert per_batch % (w * h) == 0, "per-batch features must be divisible by w*h"
    c = per_batch // (w * h)
    out_shape = (n, c, w, h)

    itemsize = jnp.dtype(x.dtype).itemsize
    layout = _choose_flat_layout(total)
    if layout is None:
        # TODO(synk): totals not divisible by 128 -- the reshape is
        # metadata-only, so return it rather than a lane-sparse kernel.
        return jnp.reshape(x, out_shape)

    rows, lane = layout
    n_chunks, chunk_rows = _choose_chunking(rows, itemsize)

    # Free, metadata-only re-expression of the contiguous buffer.
    flat = jnp.reshape(x, (rows, lane))

    flat_out = pl.pallas_call(
        _make_dma_copy_kernel(n_chunks, chunk_rows),
        out_shape=jax.ShapeDtypeStruct((rows, lane), x.dtype),
        in_specs=[pl.BlockSpec(memory_space=pl.ANY)],
        out_specs=pl.BlockSpec(memory_space=pl.ANY),
        scratch_shapes=[pltpu.SemaphoreType.DMA((n_chunks,))],
        cost_estimate=pl.CostEstimate(
            flops=0,
            transcendentals=0,
            bytes_accessed=2 * total * itemsize,
        ),
    )(flat)

    # Final NCHW view is free in the wrapper.
    return jnp.reshape(flat_out, out_shape)


if __name__ == "__main__":
    # Small shapes consistent with the module: batch=2, w=h=16, 4 channels
    # worth of flattened features -> x: (2, 4*16*16) = (2, 1024).
    W, H = 16, 16
    N, C = 2, 4
    key = jax.random.PRNGKey(0)
    x = jax.random.normal(key, (N, C * W * H), dtype=jnp.float32)

    out = make2d(x, W, H)
    out = jax.block_until_ready(out)

    ref = x.reshape(N, -1, W, H)
    assert out.shape == (N, C, W, H), out.shape
    assert out.dtype == x.dtype
    assert bool(jnp.array_equal(out, ref)), "mismatch vs reference reshape"

    # Second, slightly larger case to exercise the multi-chunk DMA path
    # (rows = 512 -> 8 concurrent DMAs), still modest (~1 MiB).
    N2, C2, W2, H2 = 8, 32, 32, 32
    x2 = jax.random.normal(jax.random.PRNGKey(0), (N2, C2 * W2 * H2), jnp.float32)
    out2 = jax.block_until_ready(make2d(x2, W2, H2))
    ref2 = x2.reshape(N2, -1, W2, H2)
    assert out2.shape == (N2, C2, W2, H2), out2.shape
    assert bool(jnp.array_equal(out2, ref2)), "mismatch vs reference reshape (large)"

    print("KERNEL_OK")
</pallas_src>

<mosaic_0001>
module attributes {stable_mosaic.version = 11 : i64} {
  func.func @kernel(%arg0: memref<4x512xf32, #tpu.memory_space<any>>, %arg1: memref<4x512xf32, #tpu.memory_space<any>>, %arg2: memref<1x!tpu.dma_semaphore, #tpu.memory_space<semaphore_mem>>) attributes {dimension_semantics = [], scalar_prefetch = 0 : i64, scratch_operands = 1 : i64, tpu.core_type = #tpu.core_type<tc>} {
    %c0_i32 = arith.constant 0 : i32
    %0 = tpu.memref_slice %arg2[%c0_i32] : memref<1x!tpu.dma_semaphore, #tpu.memory_space<semaphore_mem>> -> memref<1x!tpu.dma_semaphore, #tpu.memory_space<semaphore_mem>>
    %1 = tpu.memref_squeeze %0 : memref<1x!tpu.dma_semaphore, #tpu.memory_space<semaphore_mem>> -> memref<!tpu.dma_semaphore, #tpu.memory_space<semaphore_mem>>
    tpu.enqueue_dma source(%arg0 : memref<4x512xf32, #tpu.memory_space<any>>) target(%arg1 : memref<4x512xf32, #tpu.memory_space<any>>) target_semaphore(%1 : memref<!tpu.dma_semaphore, #tpu.memory_space<semaphore_mem>>)
    %c0_i32_0 = arith.constant 0 : i32
    %2 = tpu.memref_slice %arg2[%c0_i32_0] : memref<1x!tpu.dma_semaphore, #tpu.memory_space<semaphore_mem>> -> memref<1x!tpu.dma_semaphore, #tpu.memory_space<semaphore_mem>>
    %3 = tpu.memref_squeeze %2 : memref<1x!tpu.dma_semaphore, #tpu.memory_space<semaphore_mem>> -> memref<!tpu.dma_semaphore, #tpu.memory_space<semaphore_mem>>
    tpu.wait_dma2 semaphore(%3 : memref<!tpu.dma_semaphore, #tpu.memory_space<semaphore_mem>>) src(%arg0 : memref<4x512xf32, #tpu.memory_space<any>>) dst(%arg1 : memref<4x512xf32, #tpu.memory_space<any>>)
    return
  }
}

</mosaic_0001>

<llo_original>
// kernel: tpu_custom_call.1
$region0: #{tpu_custom_call.1}
  #allocation0 [shape = 'u32[]', space=smem, size = 0x4, offset = 0x4, fixed_abs, tag = 'smem constant byte address 0x4 - core index']
  #allocation1 [shape = 'u32[144,128]{1,0:T(1,128)}', space=vmem, size = 0x12000, scoped, tag = 'internal scratch']
  #allocation2 [shape = 's32[1]{0}', space=sflag, size = 0x4, scoped, tag = 'scratch operand']
  #allocation3 [shape = 's32[]', space=sflag, size = 0x4, offset = 0, fixed_abs, tag = 'sflag constant byte address 0x0 - dummy sync flag']
  #allocation4 [shape = 'u32[0]{0}', space=smem, size = 0, offset = 0, fixed_abs, tag = 'smem constant byte address 0x0 - null']
  %s0 = inlined_call_operand.hbm [shape: f32[4,512], index: 0, kind: input, shape index: {}]
  %s1 = inlined_call_operand.hbm [shape: f32[4,512], index: 1, kind: output, shape index: {}]
  %s2 = sld [smem:[#allocation0]]
  $region2: #{tpu_custom_call.1} parent=0
    _
  %s4 = ssub.s32 1, %s2
  %s5 = scalar_select 0, %s4, %s2
  %s7 = sshll.u32 1, 14
  %s8 = sxor.u32 4294967295, %s7
  %s11 = sshll.u32 3, 24
  %s12 = sxor.u32 4294967295, %s11
  %s13 = sand.u32 0, %s12
  %s15 = sor.u32 %s13, 0
  %18 = dma.general %s0, 256, %s1, [#allocation2], [#allocation3], [#allocation4], %s15, 0
  %s19 = smul.u32 4, 1
  %s20 = smul.u32 %s19, 4
  %s21 = sshll.u32 %s20, 4
  %22 = dma.done [#allocation2], %s21
  %23 = vsyncmov [#allocation2]
  %s24 = vpop.sfrf %23
  %p25 = scmp.eq.s32.totalorder %s24, 0
  %p26 = pneg %p25
  %28 = shalt.err (%p26)

</llo_original>
